<compile_context>
chip_gen: v5e
topology: v5e:2x2
jax: 0.10.0
libtpu: 0.0.40
codegen_flags: <defaults>
</compile_context>

<pallas_src>
import functools

import jax
import jax.numpy as jnp
from jax.experimental import pallas as pl
from jax.experimental.pallas import tpu as pltpu


F_PAD = 128  # lane-padded feature width for every small dim

# Slot indices inside the packed weight / bias stacks.
W1, W2, W4, WF1, W2A, W2G, W3 = range(7)
B1, B2, B4, BF1, BF2, B3 = range(6)


def fc_model_graph_kernel(a_ref, xn_ref, xf_ref, w_ref, b_ref, out_ref, *, inv_n):
    f32 = jnp.float32
    bf16 = jnp.bfloat16
    a = a_ref[...]                                              # (n_pad, n_pad) bf16

    # conv1: H1 = relu(A_hat @ (X @ W1) + b1)
    z1 = jnp.dot(xn_ref[...], w_ref[W1], preferred_element_type=f32)
    h1 = jnp.maximum(
        jnp.dot(a, z1.astype(bf16), preferred_element_type=f32) + b_ref[B1], 0.0)

    # conv2: H2 = relu(A_hat @ (H1 @ W2) + b2)
    z2 = jnp.dot(h1.astype(bf16), w_ref[W2], preferred_element_type=f32)
    h2 = jnp.maximum(
        jnp.dot(a, z2.astype(bf16), preferred_element_type=f32) + b_ref[B2], 0.0)
    h2b = h2.astype(bf16)

    # conv4 + mean_nodes folded:
    #   g = mean_rows(A_hat @ (H2 @ W4) + b4) = (1/N) * (colsum(A_hat) @ H2) @ W4 + b4
    colsum = jnp.sum(a.astype(f32), axis=0, keepdims=True)       # (1, n_pad)
    hm = jnp.dot(colsum.astype(bf16), h2b, preferred_element_type=f32) * inv_n
    g = jnp.dot(hm.astype(bf16), w_ref[W4], preferred_element_type=f32) + b_ref[B4]

    # fc1 + relu
    a1 = jnp.maximum(
        jnp.dot(xf_ref[...], w_ref[WF1], preferred_element_type=f32) + b_ref[BF1], 0.0)

    # fc2(cat(a1, g)) == a1 @ Wfc2[:28] + g @ Wfc2[28:] + bfc2, then relu
    a2 = jnp.maximum(
        jnp.dot(a1.astype(bf16), w_ref[W2A], preferred_element_type=f32)
        + jnp.dot(g.astype(bf16), w_ref[W2G], preferred_element_type=f32)
        + b_ref[BF2], 0.0)

    # fc3
    out_ref[...] = (jnp.dot(a2.astype(bf16), w_ref[W3], preferred_element_type=f32)
                    + b_ref[B3])


def normalize_adjacency(adj):
    """DGL GraphConv norm='both': D_in^-1/2 A^T D_out^-1/2, degrees clamped >= 1."""
    adj = adj.astype(jnp.float32)                       # adj[src, dst] = 1 for edge src->dst
    deg_out = jnp.maximum(jnp.sum(adj, axis=1), 1.0)    # out-degree of sources
    deg_in = jnp.maximum(jnp.sum(adj, axis=0), 1.0)     # in-degree of destinations
    return (deg_in[:, None] ** -0.5) * adj.T * (deg_out[None, :] ** -0.5)


def _pad2(a, rows, cols):
    a = a.astype(jnp.float32)
    out = jnp.zeros((rows, cols), jnp.float32)
    return out.at[: a.shape[0], : a.shape[1]].set(a)


def pack_weights(params):
    """Pad/pack all weights & biases ONCE (call outside the per-step forward).

    Returns (w_stack bf16 [7,128,128], b_stack f32 [6,1,128]).  Zero padding is
    exact: padded weight rows/cols and bias entries are zero, so padded lanes
    never contaminate real outputs.
    """
    (w1, b1, w2, b2, w4, b4, wf1, bf1, wfc2, bfc2, w3, b3) = params
    split = wf1.shape[1]                     # 32 - 4 = 28: torch.cat split point in fc2
    ws = [w1, w2, w4, wf1, wfc2[:split], wfc2[split:], w3]
    bs = [b1, b2, b4, bf1, bfc2, b3]
    assert max(max(w.shape) for w in ws) <= F_PAD
    w_stack = jnp.stack([_pad2(w, F_PAD, F_PAD) for w in ws]).astype(jnp.bfloat16)
    b_stack = jnp.stack([_pad2(b[None, :], 1, F_PAD) for b in bs])   # f32
    return w_stack, b_stack


@functools.partial(jax.jit, static_argnames=("out_chs",))
def fc_model_graph_forward(adj, node_feats, x, w_stack, b_stack, *, out_chs):
    """adj: [N,N] 0/1 adjacency; node_feats: [N, in_feats]; x: [numFeats]."""
    n = adj.shape[0]
    assert node_feats.shape[1] <= F_PAD and x.shape[0] <= F_PAD and out_chs <= F_PAD
    n_pad = pl.cdiv(n, F_PAD) * F_PAD

    a_hat = normalize_adjacency(adj)                              # [n, n] f32
    a_p = _pad2(a_hat, n_pad, n_pad).astype(jnp.bfloat16)         # resident bf16 A_hat
    xn_p = _pad2(node_feats, n_pad, F_PAD).astype(jnp.bfloat16)
    xf_p = _pad2(x[None, :], 1, F_PAD).astype(jnp.bfloat16)

    flops = int(2 * (2 * n_pad * n_pad * F_PAD        # A_hat @ Z1, A_hat @ Z2
                     + 2 * n_pad * F_PAD * F_PAD      # Z1, Z2 projections
                     + n_pad * F_PAD                  # colsum @ H2
                     + 5 * F_PAD * F_PAD))            # W4 + FC tail
    bytes_accessed = int(a_p.size * 2 + xn_p.size * 2 + xf_p.size * 2
                         + w_stack.size * 2 + b_stack.size * 4 + F_PAD * 4)

    vmem = pl.BlockSpec(memory_space=pltpu.MemorySpace.VMEM)
    out = pl.pallas_call(
        functools.partial(fc_model_graph_kernel, inv_n=1.0 / n),
        out_shape=jax.ShapeDtypeStruct((1, F_PAD), jnp.float32),
        in_specs=[vmem, vmem, vmem, vmem, vmem],      # everything VMEM-resident, no grid
        out_specs=vmem,
        cost_estimate=pl.CostEstimate(flops=flops, transcendentals=0,
                                      bytes_accessed=bytes_accessed),
        compiler_params=pltpu.CompilerParams(vmem_limit_bytes=32 * 1024 * 1024),
    )(a_p, xn_p, xf_p, w_stack, b_stack)

    return out[0, :out_chs]


def reference_forward(adj, node_feats, x, params):
    """Pure-JAX f32 reference of FcModelGraph.forward (single-graph batch)."""
    (w1, b1, w2, b2, w4, b4, wf1, bf1, wfc2, bfc2, w3, b3) = params
    a_hat = normalize_adjacency(adj)
    h = jnp.maximum(a_hat @ (node_feats @ w1) + b1, 0.0)
    h = jnp.maximum(a_hat @ (h @ w2) + b2, 0.0)
    h = a_hat @ (h @ w4) + b4
    g = jnp.mean(h, axis=0)                                  # dgl.mean_nodes + squeeze
    a1 = jnp.maximum(x @ wf1 + bf1, 0.0)
    a2 = jnp.maximum(jnp.concatenate([a1, g], axis=0) @ wfc2 + bfc2, 0.0)
    return a2 @ w3 + b3


def init_params(key, in_feats, hidden, out_len, num_feats, out_chs):
    ks = jax.random.split(key, 12)

    def lin(kw, kb, fi, fo):
        lim = (6.0 / (fi + fo)) ** 0.5
        w = jax.random.uniform(kw, (fi, fo), jnp.float32, -lim, lim)
        b = jax.random.uniform(kb, (fo,), jnp.float32, -0.1, 0.1)
        return w, b

    w1, b1 = lin(ks[0], ks[1], in_feats, hidden)          # GCN conv1
    w2, b2 = lin(ks[2], ks[3], hidden, hidden)            # GCN conv2
    w4, b4 = lin(ks[4], ks[5], hidden, out_len)           # GCN conv4 (conv3 unused in forward)
    wf1, bf1 = lin(ks[6], ks[7], num_feats, 32 - 4)       # fc1
    wfc2, bfc2 = lin(ks[8], ks[9], 32, 32)                # fc2
    w3, b3 = lin(ks[10], ks[11], 32, out_chs)             # fc3
    return (w1, b1, w2, b2, w4, b4, wf1, bf1, wfc2, bfc2, w3, b3)


if __name__ == "__main__":
    N = 16                                   # graph nodes
    IN_FEATS, HIDDEN, OUT_LEN = 10, 12, 4    # GCN(10, 12, 4) from the module
    NUM_FEATS, OUT_CHS = 16, 8               # FcModelGraph(numFeats, outChs)

    key = jax.random.PRNGKey(0)
    k_adj, k_nf, k_x, k_par = jax.random.split(key, 4)

    adj = (jax.random.uniform(k_adj, (N, N)) < 0.3).astype(jnp.float32)
    node_feats = jax.random.normal(k_nf, (N, IN_FEATS), jnp.float32)
    x = jax.random.normal(k_x, (NUM_FEATS,), jnp.float32)
    params = init_params(k_par, IN_FEATS, HIDDEN, OUT_LEN, NUM_FEATS, OUT_CHS)

    # Pack / pad the weights once (outside the per-step forward call).
    w_stack, b_stack = pack_weights(params)

    # TODO(synk): batched multi-graph dgl.mean_nodes would need a segment mean;
    # a single-graph batch is assumed here (matches the REINFORCE usage).
    out = fc_model_graph_forward(adj, node_feats, x, w_stack, b_stack,
                                 out_chs=OUT_CHS)
    jax.block_until_ready(out)

    ref = reference_forward(adj, node_feats, x, params)
    assert out.shape == (OUT_CHS,) and out.dtype == jnp.float32
    assert jnp.allclose(out, ref, rtol=5e-2, atol=5e-2), (out, ref)
    print("KERNEL_OK")
</pallas_src>

<mosaic_0001>
module attributes {stable_mosaic.version = 11 : i64} {
  func.func @fc_model_graph_kernel(%arg0: memref<128x128xbf16, #tpu.memory_space<vmem>>, %arg1: memref<128x128xbf16, #tpu.memory_space<vmem>>, %arg2: memref<1x128xbf16, #tpu.memory_space<vmem>>, %arg3: memref<7x128x128xbf16, #tpu.memory_space<vmem>>, %arg4: memref<6x1x128xf32, #tpu.memory_space<vmem>>, %arg5: memref<1x128xf32, #tpu.memory_space<vmem>>) attributes {dimension_semantics = [], scalar_prefetch = 0 : i64, scratch_operands = 0 : i64, tpu.core_type = #tpu.core_type<tc>} {
    %c0 = arith.constant 0 : index
    %c0_0 = arith.constant 0 : index
    %0 = vector.load %arg0[%c0, %c0_0] : memref<128x128xbf16, #tpu.memory_space<vmem>>, vector<128x128xbf16>
    %c0_1 = arith.constant 0 : index
    %c0_2 = arith.constant 0 : index
    %1 = vector.load %arg1[%c0_1, %c0_2] : memref<128x128xbf16, #tpu.memory_space<vmem>>, vector<128x128xbf16>
    %c0_3 = arith.constant 0 : index
    %c0_4 = arith.constant 0 : index
    %c0_5 = arith.constant 0 : index
    %2 = vector.load %arg3[%c0_3, %c0_4, %c0_5] : memref<7x128x128xbf16, #tpu.memory_space<vmem>>, vector<1x128x128xbf16>
    %3 = vector.shape_cast %2 : vector<1x128x128xbf16> to vector<128x128xbf16>
    %cst = arith.constant dense<0.000000e+00> : vector<128x128xf32>
    %4 = tpu.matmul %1, %3, %cst {dimension_numbers = #tpu.dot_dimension_numbers<[1], [0], [0], [1], [0, 0, 1, 1], [], []>} : vector<128x128xbf16>, vector<128x128xbf16>, vector<128x128xf32> -> vector<128x128xf32>
    %5 = arith.truncf %4 : vector<128x128xf32> to vector<128x128xbf16>
    %cst_6 = arith.constant dense<0.000000e+00> : vector<128x128xf32>
    %6 = tpu.matmul %0, %5, %cst_6 {dimension_numbers = #tpu.dot_dimension_numbers<[1], [0], [0], [1], [0, 0, 1, 1], [], []>} : vector<128x128xbf16>, vector<128x128xbf16>, vector<128x128xf32> -> vector<128x128xf32>
    %c0_7 = arith.constant 0 : index
    %c0_8 = arith.constant 0 : index
    %c0_9 = arith.constant 0 : index
    %7 = vector.load %arg4[%c0_7, %c0_8, %c0_9] : memref<6x1x128xf32, #tpu.memory_space<vmem>>, vector<1x1x128xf32>
    %8 = vector.shape_cast %7 : vector<1x1x128xf32> to vector<1x128xf32>
    %9 = vector.broadcast %8 : vector<1x128xf32> to vector<128x128xf32>
    %10 = arith.addf %6, %9 : vector<128x128xf32>
    %cst_10 = arith.constant 0.000000e+00 : f32
    %11 = vector.broadcast %cst_10 : f32 to vector<128x128xf32>
    %12 = arith.maximumf %10, %11 : vector<128x128xf32>
    %13 = arith.truncf %12 : vector<128x128xf32> to vector<128x128xbf16>
    %c1 = arith.constant 1 : index
    %c0_11 = arith.constant 0 : index
    %c0_12 = arith.constant 0 : index
    %14 = vector.load %arg3[%c1, %c0_11, %c0_12] : memref<7x128x128xbf16, #tpu.memory_space<vmem>>, vector<1x128x128xbf16>
    %15 = vector.shape_cast %14 : vector<1x128x128xbf16> to vector<128x128xbf16>
    %cst_13 = arith.constant dense<0.000000e+00> : vector<128x128xf32>
    %16 = tpu.matmul %13, %15, %cst_13 {dimension_numbers = #tpu.dot_dimension_numbers<[1], [0], [0], [1], [0, 0, 1, 1], [], []>} : vector<128x128xbf16>, vector<128x128xbf16>, vector<128x128xf32> -> vector<128x128xf32>
    %17 = arith.truncf %16 : vector<128x128xf32> to vector<128x128xbf16>
    %cst_14 = arith.constant dense<0.000000e+00> : vector<128x128xf32>
    %18 = tpu.matmul %0, %17, %cst_14 {dimension_numbers = #tpu.dot_dimension_numbers<[1], [0], [0], [1], [0, 0, 1, 1], [], []>} : vector<128x128xbf16>, vector<128x128xbf16>, vector<128x128xf32> -> vector<128x128xf32>
    %c1_15 = arith.constant 1 : index
    %c0_16 = arith.constant 0 : index
    %c0_17 = arith.constant 0 : index
    %19 = vector.load %arg4[%c1_15, %c0_16, %c0_17] : memref<6x1x128xf32, #tpu.memory_space<vmem>>, vector<1x1x128xf32>
    %20 = vector.shape_cast %19 : vector<1x1x128xf32> to vector<1x128xf32>
    %21 = vector.broadcast %20 : vector<1x128xf32> to vector<128x128xf32>
    %22 = arith.addf %18, %21 : vector<128x128xf32>
    %cst_18 = arith.constant 0.000000e+00 : f32
    %23 = vector.broadcast %cst_18 : f32 to vector<128x128xf32>
    %24 = arith.maximumf %22, %23 : vector<128x128xf32>
    %25 = arith.truncf %24 : vector<128x128xf32> to vector<128x128xbf16>
    %26 = arith.extf %0 : vector<128x128xbf16> to vector<128x128xf32>
    %cst_19 = arith.constant dense<0.000000e+00> : vector<128xf32>
    %27 = vector.multi_reduction <add>, %26, %cst_19 [0] : vector<128x128xf32> to vector<128xf32>
    %28 = vector.shape_cast %27 : vector<128xf32> to vector<1x128xf32>
    %29 = arith.truncf %28 : vector<1x128xf32> to vector<1x128xbf16>
    %cst_20 = arith.constant dense<0.000000e+00> : vector<1x128xf32>
    %30 = tpu.matmul %29, %25, %cst_20 {dimension_numbers = #tpu.dot_dimension_numbers<[1], [0], [0], [1], [0, 0, 1, 1], [], []>} : vector<1x128xbf16>, vector<128x128xbf16>, vector<1x128xf32> -> vector<1x128xf32>
    %cst_21 = arith.constant 6.250000e-02 : f32
    %31 = vector.broadcast %cst_21 : f32 to vector<1x128xf32>
    %32 = arith.mulf %30, %31 : vector<1x128xf32>
    %33 = arith.truncf %32 : vector<1x128xf32> to vector<1x128xbf16>
    %c2 = arith.constant 2 : index
    %c0_22 = arith.constant 0 : index
    %c0_23 = arith.constant 0 : index
    %34 = vector.load %arg3[%c2, %c0_22, %c0_23] : memref<7x128x128xbf16, #tpu.memory_space<vmem>>, vector<1x128x128xbf16>
    %35 = vector.shape_cast %34 : vector<1x128x128xbf16> to vector<128x128xbf16>
    %cst_24 = arith.constant dense<0.000000e+00> : vector<1x128xf32>
    %36 = tpu.matmul %33, %35, %cst_24 {dimension_numbers = #tpu.dot_dimension_numbers<[1], [0], [0], [1], [0, 0, 1, 1], [], []>} : vector<1x128xbf16>, vector<128x128xbf16>, vector<1x128xf32> -> vector<1x128xf32>
    %c2_25 = arith.constant 2 : index
    %c0_26 = arith.constant 0 : index
    %c0_27 = arith.constant 0 : index
    %37 = vector.load %arg4[%c2_25, %c0_26, %c0_27] : memref<6x1x128xf32, #tpu.memory_space<vmem>>, vector<1x1x128xf32>
    %38 = vector.shape_cast %37 : vector<1x1x128xf32> to vector<1x128xf32>
    %39 = arith.addf %36, %38 : vector<1x128xf32>
    %c0_28 = arith.constant 0 : index
    %c0_29 = arith.constant 0 : index
    %40 = vector.load %arg2[%c0_28, %c0_29] : memref<1x128xbf16, #tpu.memory_space<vmem>>, vector<1x128xbf16>
    %c3 = arith.constant 3 : index
    %c0_30 = arith.constant 0 : index
    %c0_31 = arith.constant 0 : index
    %41 = vector.load %arg3[%c3, %c0_30, %c0_31] : memref<7x128x128xbf16, #tpu.memory_space<vmem>>, vector<1x128x128xbf16>
    %42 = vector.shape_cast %41 : vector<1x128x128xbf16> to vector<128x128xbf16>
    %cst_32 = arith.constant dense<0.000000e+00> : vector<1x128xf32>
    %43 = tpu.matmul %40, %42, %cst_32 {dimension_numbers = #tpu.dot_dimension_numbers<[1], [0], [0], [1], [0, 0, 1, 1], [], []>} : vector<1x128xbf16>, vector<128x128xbf16>, vector<1x128xf32> -> vector<1x128xf32>
    %c3_33 = arith.constant 3 : index
    %c0_34 = arith.constant 0 : index
    %c0_35 = arith.constant 0 : index
    %44 = vector.load %arg4[%c3_33, %c0_34, %c0_35] : memref<6x1x128xf32, #tpu.memory_space<vmem>>, vector<1x1x128xf32>
    %45 = vector.shape_cast %44 : vector<1x1x128xf32> to vector<1x128xf32>
    %46 = arith.addf %43, %45 : vector<1x128xf32>
    %cst_36 = arith.constant 0.000000e+00 : f32
    %47 = vector.broadcast %cst_36 : f32 to vector<1x128xf32>
    %48 = arith.maximumf %46, %47 : vector<1x128xf32>
    %49 = arith.truncf %48 : vector<1x128xf32> to vector<1x128xbf16>
    %c4 = arith.constant 4 : index
    %c0_37 = arith.constant 0 : index
    %c0_38 = arith.constant 0 : index
    %50 = vector.load %arg3[%c4, %c0_37, %c0_38] : memref<7x128x128xbf16, #tpu.memory_space<vmem>>, vector<1x128x128xbf16>
    %51 = vector.shape_cast %50 : vector<1x128x128xbf16> to vector<128x128xbf16>
    %cst_39 = arith.constant dense<0.000000e+00> : vector<1x128xf32>
    %52 = tpu.matmul %49, %51, %cst_39 {dimension_numbers = #tpu.dot_dimension_numbers<[1], [0], [0], [1], [0, 0, 1, 1], [], []>} : vector<1x128xbf16>, vector<128x128xbf16>, vector<1x128xf32> -> vector<1x128xf32>
    %53 = arith.truncf %39 : vector<1x128xf32> to vector<1x128xbf16>
    %c5 = arith.constant 5 : index
    %c0_40 = arith.constant 0 : index
    %c0_41 = arith.constant 0 : index
    %54 = vector.load %arg3[%c5, %c0_40, %c0_41] : memref<7x128x128xbf16, #tpu.memory_space<vmem>>, vector<1x128x128xbf16>
    %55 = vector.shape_cast %54 : vector<1x128x128xbf16> to vector<128x128xbf16>
    %cst_42 = arith.constant dense<0.000000e+00> : vector<1x128xf32>
    %56 = tpu.matmul %53, %55, %cst_42 {dimension_numbers = #tpu.dot_dimension_numbers<[1], [0], [0], [1], [0, 0, 1, 1], [], []>} : vector<1x128xbf16>, vector<128x128xbf16>, vector<1x128xf32> -> vector<1x128xf32>
    %57 = arith.addf %52, %56 : vector<1x128xf32>
    %c4_43 = arith.constant 4 : index
    %c0_44 = arith.constant 0 : index
    %c0_45 = arith.constant 0 : index
    %58 = vector.load %arg4[%c4_43, %c0_44, %c0_45] : memref<6x1x128xf32, #tpu.memory_space<vmem>>, vector<1x1x128xf32>
    %59 = vector.shape_cast %58 : vector<1x1x128xf32> to vector<1x128xf32>
    %60 = arith.addf %57, %59 : vector<1x128xf32>
    %cst_46 = arith.constant 0.000000e+00 : f32
    %61 = vector.broadcast %cst_46 : f32 to vector<1x128xf32>
    %62 = arith.maximumf %60, %61 : vector<1x128xf32>
    %63 = arith.truncf %62 : vector<1x128xf32> to vector<1x128xbf16>
    %c6 = arith.constant 6 : index
    %c0_47 = arith.constant 0 : index
    %c0_48 = arith.constant 0 : index
    %64 = vector.load %arg3[%c6, %c0_47, %c0_48] : memref<7x128x128xbf16, #tpu.memory_space<vmem>>, vector<1x128x128xbf16>
    %65 = vector.shape_cast %64 : vector<1x128x128xbf16> to vector<128x128xbf16>
    %cst_49 = arith.constant dense<0.000000e+00> : vector<1x128xf32>
    %66 = tpu.matmul %63, %65, %cst_49 {dimension_numbers = #tpu.dot_dimension_numbers<[1], [0], [0], [1], [0, 0, 1, 1], [], []>} : vector<1x128xbf16>, vector<128x128xbf16>, vector<1x128xf32> -> vector<1x128xf32>
    %c5_50 = arith.constant 5 : index
    %c0_51 = arith.constant 0 : index
    %c0_52 = arith.constant 0 : index
    %67 = vector.load %arg4[%c5_50, %c0_51, %c0_52] : memref<6x1x128xf32, #tpu.memory_space<vmem>>, vector<1x1x128xf32>
    %68 = vector.shape_cast %67 : vector<1x1x128xf32> to vector<1x128xf32>
    %69 = arith.addf %66, %68 : vector<1x128xf32>
    %c0_53 = arith.constant 0 : index
    %c0_54 = arith.constant 0 : index
    %70 = vector.load %arg5[%c0_53, %c0_54] : memref<1x128xf32, #tpu.memory_space<vmem>>, vector<1x128xf32>
    tpu.vector_store %arg5[%c0_53, %c0_54], %69 {strides = array<i32>} : memref<1x128xf32, #tpu.memory_space<vmem>>, vector<1x128xf32>,
    return
  }
}

</mosaic_0001>

<llo_original>
// kernel: fc_model_graph_forward.1
$region0: #{fc_model_graph_forward.1}
  #allocation0 [shape = 'u32[]', space=smem, size = 0x4, offset = 0x4, fixed_abs, tag = 'smem constant byte address 0x4 - core index']
  #allocation1 [shape = 'u32[72,128]{1,0:T(1,128)}', space=vmem, size = 0x9000, scoped, tag = 'internal scratch']
  %s0 = inlined_call_operand.vmem [shape: bf16[128,128], index: 0, kind: input, shape index: {}]
  %s1 = inlined_call_operand.vmem [shape: bf16[128,128], index: 1, kind: input, shape index: {}]
  %s2 = inlined_call_operand.vmem [shape: bf16[1,128], index: 2, kind: input, shape index: {}]
  %s3 = inlined_call_operand.hbm [shape: bf16[7,128,128], index: 3, kind: input, shape index: {}]
  %s4 = inlined_call_operand.vmem [shape: f32[6,1,128], index: 4, kind: input, shape index: {}]
  %s5 = inlined_call_operand.vmem [shape: f32[1,128], index: 5, kind: output, shape index: {}]
  %s6 = sld [smem:[#allocation0]]
  $region34: #{fc_model_graph_forward.1} parent=0
    _
  %s8 = ssub.s32 1, %s6
  %s9 = scalar_select 0, %s8, %s6
  $region1: #{fc_model_graph_forward.1} parent=0
    #allocation2 [shape = 'u8[229376]{0}', space=vmem, size = 0x38000, scoped, tag = 'input window, operand 3, single buffered']
    #allocation3 [shape = 's32[1]{0}', space=sflag, size = 0x4, scoped, tag = 'scoped memory for fc_model_graph_forward.1']
    %10 = vsyncpa [#allocation3], 0
    // Predicated region
    $region2: #{fc_model_graph_forward.1} parent=1 // pred_check
      _
    $region3: #{fc_model_graph_forward.1} parent=1 // pred_check_branch
      %12 = sbr.rel (0) target = $region5
    $region4: #{fc_model_graph_forward.1} parent=1 // pred_region
      _
    $region5: #{fc_model_graph_forward.1} parent=1 // pred_fallthru
      _
    // Predicated region
    $region6: #{fc_model_graph_forward.1} parent=1 // pred_check
      _
    $region7: #{fc_model_graph_forward.1} parent=1 // pred_check_branch
      %14 = sbr.rel (0) target = $region9
    $region8: #{fc_model_graph_forward.1} parent=1 // pred_region
      _
    $region9: #{fc_model_graph_forward.1} parent=1 // pred_fallthru
      _
    // Predicated region
    $region10: #{fc_model_graph_forward.1} parent=1 // pred_check
      _
    $region11: #{fc_model_graph_forward.1} parent=1 // pred_check_branch
      %16 = sbr.rel (0) target = $region13
    $region12: #{fc_model_graph_forward.1} parent=1 // pred_region
      _
    $region13: #{fc_model_graph_forward.1} parent=1 // pred_fallthru
      _
    // Predicated region
    $region14: #{fc_model_graph_forward.1} parent=1 // pred_check
      _
    $region15: #{fc_model_graph_forward.1} parent=1 // pred_check_branch
      %18 = sbr.rel (0) target = $region17
    $region16: #{fc_model_graph_forward.1} parent=1 // pred_region
      %20 = vsyncadd [#allocation3], 0
      %s21 = sshll.u32 %s3, 4
      %s22 = int_to_ptr.hbm [resolvable:$true] %s21
      %s23 = sshll.u32 [#allocation2], 4
      %s24 = int_to_ptr.vmem [resolvable:$true] %s23
      %29 = dma.hbm_to_vmem [thread:$0]  %s22, 7168, %s24, [#allocation3], 64, 64, 4
    $region17: #{fc_model_graph_forward.1} parent=1 // pred_fallthru
      _
    // Predicated region
    $region18: #{fc_model_graph_forward.1} parent=1 // pred_check
      _
    $region19: #{fc_model_graph_forward.1} parent=1 // pred_check_branch
      %31 = sbr.rel (0) target = $region21
    $region20: #{fc_model_graph_forward.1} parent=1 // pred_region
      _
    $region21: #{fc_model_graph_forward.1} parent=1 // pred_fallthru
      _
    // Predicated region
    $region22: #{fc_model_graph_forward.1} parent=1 // pred_check
      _
    $region23: #{fc_model_graph_forward.1} parent=1 // pred_check_branch
      %33 = sbr.rel (0) target = $region25
    $region24: #{fc_model_graph_forward.1} parent=1 // pred_region
      %35 = dma.done [#allocation3], 7168
    $region25: #{fc_model_graph_forward.1} parent=1 // pred_fallthru
      _
    %v36 = vld [vmem:[%s0] sm:$0xf]
    %v37 = vld [vmem:[%s0 + $0x4] sm:$0xf]
    %v38 = vld [vmem:[%s0 + $0x8] sm:$0xf]
    %v39 = vld [vmem:[%s0 + $0xc] sm:$0xf]
    %v40 = vld [vmem:[%s0 + $0x10] sm:$0xf]
    %v41 = vld [vmem:[%s0 + $0x14] sm:$0xf]
    %v42 = vld [vmem:[%s0 + $0x18] sm:$0xf]
    %v43 = vld [vmem:[%s0 + $0x1c] sm:$0xf]
    %v44 = vld [vmem:[%s0 + $0x20] sm:$0xf]
    %v45 = vld [vmem:[%s0 + $0x24] sm:$0xf]
    %v46 = vld [vmem:[%s0 + $0x28] sm:$0xf]
    %v47 = vld [vmem:[%s0 + $0x2c] sm:$0xf]
    %v48 = vld [vmem:[%s0 + $0x30] sm:$0xf]
    %v49 = vld [vmem:[%s0 + $0x34] sm:$0xf]
    %v50 = vld [vmem:[%s0 + $0x38] sm:$0xf]
    %v51 = vld [vmem:[%s0 + $0x3c] sm:$0xf]
    %v52 = vld [vmem:[%s1] sm:$0xf]
    %v53 = vld [vmem:[%s1 + $0x4] sm:$0xf]
    %v54 = vld [vmem:[%s1 + $0x8] sm:$0xf]
    %v55 = vld [vmem:[%s1 + $0xc] sm:$0xf]
    %v56 = vld [vmem:[%s1 + $0x10] sm:$0xf]
    %v57 = vld [vmem:[%s1 + $0x14] sm:$0xf]
    %v58 = vld [vmem:[%s1 + $0x18] sm:$0xf]
    %v59 = vld [vmem:[%s1 + $0x1c] sm:$0xf]
    %v60 = vld [vmem:[%s1 + $0x20] sm:$0xf]
    %v61 = vld [vmem:[%s1 + $0x24] sm:$0xf]
    %v62 = vld [vmem:[%s1 + $0x28] sm:$0xf]
    %v63 = vld [vmem:[%s1 + $0x2c] sm:$0xf]
    %v64 = vld [vmem:[%s1 + $0x30] sm:$0xf]
    %v65 = vld [vmem:[%s1 + $0x34] sm:$0xf]
    %v66 = vld [vmem:[%s1 + $0x38] sm:$0xf]
    %v67 = vld [vmem:[%s1 + $0x3c] sm:$0xf]
    %v68 = vld [vmem:[#allocation2] sm:$0xf]
    %v69 = vld [vmem:[#allocation2 + $0x4] sm:$0xf]
    %v70 = vld [vmem:[#allocation2 + $0x8] sm:$0xf]
    %v71 = vld [vmem:[#allocation2 + $0xc] sm:$0xf]
    %v72 = vld [vmem:[#allocation2 + $0x10] sm:$0xf]
    %v73 = vld [vmem:[#allocation2 + $0x14] sm:$0xf]
    %v74 = vld [vmem:[#allocation2 + $0x18] sm:$0xf]
    %v75 = vld [vmem:[#allocation2 + $0x1c] sm:$0xf]
    %v76 = vld [vmem:[#allocation2 + $0x20] sm:$0xf]
    %v77 = vld [vmem:[#allocation2 + $0x24] sm:$0xf]
    %v78 = vld [vmem:[#allocation2 + $0x28] sm:$0xf]
    %v79 = vld [vmem:[#allocation2 + $0x2c] sm:$0xf]
    %v80 = vld [vmem:[#allocation2 + $0x30] sm:$0xf]
    %v81 = vld [vmem:[#allocation2 + $0x34] sm:$0xf]
    %v82 = vld [vmem:[#allocation2 + $0x38] sm:$0xf]
    %v83 = vld [vmem:[#allocation2 + $0x3c] sm:$0xf]
    %v100 = vunpack.c.l.b16 %v52
    %v101 = vunpack.c.l.b16 %v53
    %v102 = vunpack.c.l.b16 %v54
    %v103 = vunpack.c.l.b16 %v55
    %v104 = vunpack.c.l.b16 %v56
    %v105 = vunpack.c.l.b16 %v57
    %v106 = vunpack.c.l.b16 %v58
    %v107 = vunpack.c.l.b16 %v59
    %v108 = vunpack.c.l.b16 %v60
    %v109 = vunpack.c.l.b16 %v61
    %v110 = vunpack.c.l.b16 %v62
    %v111 = vunpack.c.l.b16 %v63
    %v112 = vunpack.c.l.b16 %v64
    %v113 = vunpack.c.l.b16 %v65
    %v114 = vunpack.c.l.b16 %v66
    %v115 = vunpack.c.l.b16 %v67
    %v116 = vpack.c.b16 %v101, %v100
    %v117 = vpack.c.b16 %v103, %v102
    %v118 = vpack.c.b16 %v105, %v104
    %v119 = vpack.c.b16 %v107, %v106
    %v120 = vpack.c.b16 %v109, %v108
    %v121 = vpack.c.b16 %v111, %v110
    %v122 = vpack.c.b16 %v113, %v112
    %v123 = vpack.c.b16 %v115, %v114
    %v148 = vunpack.c.l.b16 %v68
    %v149 = vunpack.c.l.b16 %v69
    %v150 = vunpack.c.l.b16 %v70
    %v151 = vunpack.c.l.b16 %v71
    %v152 = vunpack.c.l.b16 %v72
    %v153 = vunpack.c.l.b16 %v73
    %v154 = vunpack.c.l.b16 %v74
    %v155 = vunpack.c.l.b16 %v75
    %v156 = vunpack.c.l.b16 %v76
    %v157 = vunpack.c.l.b16 %v77
    %v158 = vunpack.c.l.b16 %v78
    %v159 = vunpack.c.l.b16 %v79
    %v160 = vunpack.c.l.b16 %v80
    %v161 = vunpack.c.l.b16 %v81
    %v162 = vunpack.c.l.b16 %v82
    %v163 = vunpack.c.l.b16 %v83
    %v164 = vpack.c.b16 %v149, %v148
    %v165 = vpack.c.b16 %v151, %v150
    %v166 = vpack.c.b16 %v153, %v152
    %v167 = vpack.c.b16 %v155, %v154
    %v168 = vpack.c.b16 %v157, %v156
    %v169 = vpack.c.b16 %v159, %v158
    %v170 = vpack.c.b16 %v161, %v160
    %v171 = vpack.c.b16 %v163, %v162
    %180 = vmatpush.bf16.msra.mxu0 %v171
    %181 = vmatpush.bf16.msra.mxu0 %v170
    %182 = vmatpush.bf16.msra.mxu0 %v169
    %183 = vmatpush.bf16.msra.mxu0 %v168
    %184 = vmatpush.bf16.msra.mxu0 %v167
    %185 = vmatpush.bf16.msra.mxu0 %v166
    %186 = vmatpush.bf16.msra.mxu0 %v165
    %187 = vmatpush.bf16.msra.mxu0 %v164
    %188 = vmatmul.bf16.gmra.mxu0 %v116
    %v189 = vpop.f32.mrf.mxu0
    %v190 = vadd.f32 0.0, %v189
    %v191 = vpop.f32.mrf.mxu0
    %v192 = vadd.f32 0.0, %v191
    %193 = vmatmul.bf16.gmra.mxu0 %v117
    %v194 = vpop.f32.mrf.mxu0
    %v195 = vadd.f32 0.0, %v194
    %v196 = vpop.f32.mrf.mxu0
    %v197 = vadd.f32 0.0, %v196
    %198 = vmatmul.bf16.gmra.mxu0 %v118
    %v199 = vpop.f32.mrf.mxu0
    %v200 = vadd.f32 0.0, %v199
    %v201 = vpop.f32.mrf.mxu0
    %v202 = vadd.f32 0.0, %v201
    %203 = vmatmul.bf16.gmra.mxu0 %v119
    %v204 = vpop.f32.mrf.mxu0
    %v205 = vadd.f32 0.0, %v204
    %v206 = vpop.f32.mrf.mxu0
    %v207 = vadd.f32 0.0, %v206
    %208 = vmatmul.bf16.gmra.mxu0 %v120
    %v209 = vpop.f32.mrf.mxu0
    %v210 = vadd.f32 0.0, %v209
    %v211 = vpop.f32.mrf.mxu0
    %v212 = vadd.f32 0.0, %v211
    %213 = vmatmul.bf16.gmra.mxu0 %v121
    %v214 = vpop.f32.mrf.mxu0
    %v215 = vadd.f32 0.0, %v214
    %v216 = vpop.f32.mrf.mxu0
    %v217 = vadd.f32 0.0, %v216
    %218 = vmatmul.bf16.gmra.mxu0 %v122
    %v219 = vpop.f32.mrf.mxu0
    %v220 = vadd.f32 0.0, %v219
    %v221 = vpop.f32.mrf.mxu0
    %v222 = vadd.f32 0.0, %v221
    %223 = vmatmul.bf16.gmra.mxu0 %v123
    %v224 = vpop.f32.mrf.mxu0
    %v225 = vadd.f32 0.0, %v224
    %v226 = vpop.f32.mrf.mxu0
    %v227 = vadd.f32 0.0, %v226
    %228 = vdwg.mxu0
    %v229 = vpack.c.bf16 %v192, %v190
    %v230 = vpack.c.bf16 %v197, %v195
    %v231 = vpack.c.bf16 %v202, %v200
    %v232 = vpack.c.bf16 %v207, %v205
    %v233 = vpack.c.bf16 %v212, %v210
    %v234 = vpack.c.bf16 %v217, %v215
    %v235 = vpack.c.bf16 %v222, %v220
    %v236 = vpack.c.bf16 %v227, %v225
    %v237 = vld [vmem:[%s4] sm:$0x1]
    %v239 = vperm.slane %v237, 0
    %v257 = vunpack.c.l.b16 %v36
    %v258 = vunpack.c.l.b16 %v37
    %v259 = vunpack.c.l.b16 %v38
    %v260 = vunpack.c.l.b16 %v39
    %v261 = vunpack.c.l.b16 %v40
    %v262 = vunpack.c.l.b16 %v41
    %v263 = vunpack.c.l.b16 %v42
    %v264 = vunpack.c.l.b16 %v43
    %v265 = vunpack.c.l.b16 %v44
    %v266 = vunpack.c.l.b16 %v45
    %v267 = vunpack.c.l.b16 %v46
    %v268 = vunpack.c.l.b16 %v47
    %v269 = vunpack.c.l.b16 %v48
    %v270 = vunpack.c.l.b16 %v49
    %v271 = vunpack.c.l.b16 %v50
    %v272 = vunpack.c.l.b16 %v51
    %v273 = vpack.c.b16 %v258, %v257
    %v274 = vpack.c.b16 %v260, %v259
    %v275 = vpack.c.b16 %v262, %v261
    %v276 = vpack.c.b16 %v264, %v263
    %v277 = vpack.c.b16 %v266, %v265
    %v278 = vpack.c.b16 %v268, %v267
    %v279 = vpack.c.b16 %v270, %v269
    %v280 = vpack.c.b16 %v272, %v271
    %289 = vmatpush.bf16.msra.mxu0 %v236
    %290 = vmatpush.bf16.msra.mxu0 %v235
    %291 = vmatpush.bf16.msra.mxu0 %v234
    %292 = vmatpush.bf16.msra.mxu0 %v233
    %293 = vmatpush.bf16.msra.mxu0 %v232
    %294 = vmatpush.bf16.msra.mxu0 %v231
    %295 = vmatpush.bf16.msra.mxu0 %v230
    %296 = vmatpush.bf16.msra.mxu0 %v229
    %297 = vmatmul.bf16.gmra.mxu0 %v273
    %v298 = vpop.f32.mrf.mxu0
    %v299 = vadd.f32 %v239, %v298
    %v300 = vpop.f32.mrf.mxu0
    %v301 = vadd.f32 %v239, %v300
    %302 = vmatmul.bf16.gmra.mxu0 %v274
    %v303 = vpop.f32.mrf.mxu0
    %v304 = vadd.f32 %v239, %v303
    %v305 = vpop.f32.mrf.mxu0
    %v306 = vadd.f32 %v239, %v305
    %307 = vmatmul.bf16.gmra.mxu0 %v275
    %v308 = vpop.f32.mrf.mxu0
    %v309 = vadd.f32 %v239, %v308
    %v310 = vpop.f32.mrf.mxu0
    %v311 = vadd.f32 %v239, %v310
    %312 = vmatmul.bf16.gmra.mxu0 %v276
    %v313 = vpop.f32.mrf.mxu0
    %v314 = vadd.f32 %v239, %v313
    %v315 = vpop.f32.mrf.mxu0
    %v316 = vadd.f32 %v239, %v315
    %317 = vmatmul.bf16.gmra.mxu0 %v277
    %v318 = vpop.f32.mrf.mxu0
    %v319 = vadd.f32 %v239, %v318
    %v320 = vpop.f32.mrf.mxu0
    %v321 = vadd.f32 %v239, %v320
    %322 = vmatmul.bf16.gmra.mxu0 %v278
    %v323 = vpop.f32.mrf.mxu0
    %v324 = vadd.f32 %v239, %v323
    %v325 = vpop.f32.mrf.mxu0
    %v326 = vadd.f32 %v239, %v325
    %327 = vmatmul.bf16.gmra.mxu0 %v279
    %v328 = vpop.f32.mrf.mxu0
    %v329 = vadd.f32 %v239, %v328
    %v330 = vpop.f32.mrf.mxu0
    %v331 = vadd.f32 %v239, %v330
    %332 = vmatmul.bf16.gmra.mxu0 %v280
    %v333 = vpop.f32.mrf.mxu0
    %v334 = vadd.f32 %v239, %v333
    %v335 = vpop.f32.mrf.mxu0
    %v336 = vadd.f32 %v239, %v335
    %337 = vdwg.mxu0
    %v338 = vmax.f32 %v299, 0.0
    %v339 = vmax.f32 %v301, 0.0
    %v340 = vmax.f32 %v304, 0.0
    %v341 = vmax.f32 %v306, 0.0
    %v342 = vmax.f32 %v309, 0.0
    %v343 = vmax.f32 %v311, 0.0
    %v344 = vmax.f32 %v314, 0.0
    %v345 = vmax.f32 %v316, 0.0
    %v346 = vmax.f32 %v319, 0.0
    %v347 = vmax.f32 %v321, 0.0
    %v348 = vmax.f32 %v324, 0.0
    %v349 = vmax.f32 %v326, 0.0
    %v350 = vmax.f32 %v329, 0.0
    %v351 = vmax.f32 %v331, 0.0
    %v352 = vmax.f32 %v334, 0.0
    %v353 = vmax.f32 %v336, 0.0
    %v354 = vpack.c.bf16 %v339, %v338
    %v355 = vpack.c.bf16 %v341, %v340
    %v356 = vpack.c.bf16 %v343, %v342
    %v357 = vpack.c.bf16 %v345, %v344
    %v358 = vpack.c.bf16 %v347, %v346
    %v359 = vpack.c.bf16 %v349, %v348
    %v360 = vpack.c.bf16 %v351, %v350
    %v361 = vpack.c.bf16 %v353, %v352
    %s362 = scalar_lea.vmem [#allocation2], 64
    %v363 = vld [vmem:[%s362] sm:$0xf]
    %v364 = vld [vmem:[%s362 + $0x4] sm:$0xf]
    %v365 = vld [vmem:[%s362 + $0x8] sm:$0xf]
    %v366 = vld [vmem:[%s362 + $0xc] sm:$0xf]
    %v367 = vld [vmem:[%s362 + $0x10] sm:$0xf]
    %v368 = vld [vmem:[%s362 + $0x14] sm:$0xf]
    %v369 = vld [vmem:[%s362 + $0x18] sm:$0xf]
    %v370 = vld [vmem:[%s362 + $0x1c] sm:$0xf]
    %v371 = vld [vmem:[%s362 + $0x20] sm:$0xf]
    %v372 = vld [vmem:[%s362 + $0x24] sm:$0xf]
    %v373 = vld [vmem:[%s362 + $0x28] sm:$0xf]
    %v374 = vld [vmem:[%s362 + $0x2c] sm:$0xf]
    %v375 = vld [vmem:[%s362 + $0x30] sm:$0xf]
    %v376 = vld [vmem:[%s362 + $0x34] sm:$0xf]
    %v377 = vld [vmem:[%s362 + $0x38] sm:$0xf]
    %v378 = vld [vmem:[%s362 + $0x3c] sm:$0xf]
    %v395 = vunpack.c.l.b16 %v363
    %v396 = vunpack.c.l.b16 %v364
    %v397 = vunpack.c.l.b16 %v365
    %v398 = vunpack.c.l.b16 %v366
    %v399 = vunpack.c.l.b16 %v367
    %v400 = vunpack.c.l.b16 %v368
    %v401 = vunpack.c.l.b16 %v369
    %v402 = vunpack.c.l.b16 %v370
    %v403 = vunpack.c.l.b16 %v371
    %v404 = vunpack.c.l.b16 %v372
    %v405 = vunpack.c.l.b16 %v373
    %v406 = vunpack.c.l.b16 %v374
    %v407 = vunpack.c.l.b16 %v375
    %v408 = vunpack.c.l.b16 %v376
    %v409 = vunpack.c.l.b16 %v377
    %v410 = vunpack.c.l.b16 %v378
    %v411 = vpack.c.b16 %v396, %v395
    %v412 = vpack.c.b16 %v398, %v397
    %v413 = vpack.c.b16 %v400, %v399
    %v414 = vpack.c.b16 %v402, %v401
    %v415 = vpack.c.b16 %v404, %v403
    %v416 = vpack.c.b16 %v406, %v405
    %v417 = vpack.c.b16 %v408, %v407
    %v418 = vpack.c.b16 %v410, %v409
    %427 = vmatpush.bf16.msra.mxu0 %v418
    %428 = vmatpush.bf16.msra.mxu0 %v417
    %429 = vmatpush.bf16.msra.mxu0 %v416
    %430 = vmatpush.bf16.msra.mxu0 %v415
    %431 = vmatpush.bf16.msra.mxu0 %v414
    %432 = vmatpush.bf16.msra.mxu0 %v413
    %433 = vmatpush.bf16.msra.mxu0 %v412
    %434 = vmatpush.bf16.msra.mxu0 %v411
    %435 = vmatmul.bf16.gmra.mxu0 %v354
    %v436 = vpop.f32.mrf.mxu0
    %v437 = vadd.f32 0.0, %v436
    %v438 = vpop.f32.mrf.mxu0
    %v439 = vadd.f32 0.0, %v438
    %440 = vmatmul.bf16.gmra.mxu0 %v355
    %v441 = vpop.f32.mrf.mxu0
    %v442 = vadd.f32 0.0, %v441
    %v443 = vpop.f32.mrf.mxu0
    %v444 = vadd.f32 0.0, %v443
    %445 = vmatmul.bf16.gmra.mxu0 %v356
    %v446 = vpop.f32.mrf.mxu0
    %v447 = vadd.f32 0.0, %v446
    %v448 = vpop.f32.mrf.mxu0
    %v449 = vadd.f32 0.0, %v448
    %450 = vmatmul.bf16.gmra.mxu0 %v357
    %v451 = vpop.f32.mrf.mxu0
    %v452 = vadd.f32 0.0, %v451
    %v453 = vpop.f32.mrf.mxu0
    %v454 = vadd.f32 0.0, %v453
    %455 = vmatmul.bf16.gmra.mxu0 %v358
    %v456 = vpop.f32.mrf.mxu0
    %v457 = vadd.f32 0.0, %v456
    %v458 = vpop.f32.mrf.mxu0
    %v459 = vadd.f32 0.0, %v458
    %460 = vmatmul.bf16.gmra.mxu0 %v359
    %v461 = vpop.f32.mrf.mxu0
    %v462 = vadd.f32 0.0, %v461
    %v463 = vpop.f32.mrf.mxu0
    %v464 = vadd.f32 0.0, %v463
    %465 = vmatmul.bf16.gmra.mxu0 %v360
    %v466 = vpop.f32.mrf.mxu0
    %v467 = vadd.f32 0.0, %v466
    %v468 = vpop.f32.mrf.mxu0
    %v469 = vadd.f32 0.0, %v468
    %470 = vmatmul.bf16.gmra.mxu0 %v361
    %v471 = vpop.f32.mrf.mxu0
    %v472 = vadd.f32 0.0, %v471
    %v473 = vpop.f32.mrf.mxu0
    %v474 = vadd.f32 0.0, %v473
    %475 = vdwg.mxu0
    %v476 = vpack.c.bf16 %v439, %v437
    %v477 = vpack.c.bf16 %v444, %v442
    %v478 = vpack.c.bf16 %v449, %v447
    %v479 = vpack.c.bf16 %v454, %v452
    %v480 = vpack.c.bf16 %v459, %v457
    %v481 = vpack.c.bf16 %v464, %v462
    %v482 = vpack.c.bf16 %v469, %v467
    %v483 = vpack.c.bf16 %v474, %v472
    %s484 = scalar_lea.vmem %s4, 1
    %v485 = vld [vmem:[%s484] sm:$0x1]
    %v487 = vperm.slane %v485, 0
    %489 = vmatpush.bf16.msra.mxu0 %v483
    %490 = vmatpush.bf16.msra.mxu0 %v482
    %491 = vmatpush.bf16.msra.mxu0 %v481
    %492 = vmatpush.bf16.msra.mxu0 %v480
    %493 = vmatpush.bf16.msra.mxu0 %v479
    %494 = vmatpush.bf16.msra.mxu0 %v478
    %495 = vmatpush.bf16.msra.mxu0 %v477
    %496 = vmatpush.bf16.msra.mxu0 %v476
    %497 = vmatmul.bf16.gmra.mxu0 %v273
    %v498 = vpop.f32.mrf.mxu0
    %v499 = vadd.f32 %v487, %v498
    %v500 = vpop.f32.mrf.mxu0
    %v501 = vadd.f32 %v487, %v500
    %502 = vmatmul.bf16.gmra.mxu0 %v274
    %v503 = vpop.f32.mrf.mxu0
    %v504 = vadd.f32 %v487, %v503
    %v505 = vpop.f32.mrf.mxu0
    %v506 = vadd.f32 %v487, %v505
    %507 = vmatmul.bf16.gmra.mxu0 %v275
    %v508 = vpop.f32.mrf.mxu0
    %v509 = vadd.f32 %v487, %v508
    %v510 = vpop.f32.mrf.mxu0
    %v511 = vadd.f32 %v487, %v510
    %512 = vmatmul.bf16.gmra.mxu0 %v276
    %v513 = vpop.f32.mrf.mxu0
    %v514 = vadd.f32 %v487, %v513
    %v515 = vpop.f32.mrf.mxu0
    %v516 = vadd.f32 %v487, %v515
    %517 = vmatmul.bf16.gmra.mxu0 %v277
    %v518 = vpop.f32.mrf.mxu0
    %v519 = vadd.f32 %v487, %v518
    %v520 = vpop.f32.mrf.mxu0
    %v521 = vadd.f32 %v487, %v520
    %522 = vmatmul.bf16.gmra.mxu0 %v278
    %v523 = vpop.f32.mrf.mxu0
    %v524 = vadd.f32 %v487, %v523
    %v525 = vpop.f32.mrf.mxu0
    %v526 = vadd.f32 %v487, %v525
    %527 = vmatmul.bf16.gmra.mxu0 %v279
    %v528 = vpop.f32.mrf.mxu0
    %v529 = vadd.f32 %v487, %v528
    %v530 = vpop.f32.mrf.mxu0
    %v531 = vadd.f32 %v487, %v530
    %532 = vmatmul.bf16.gmra.mxu0 %v280
    %v533 = vpop.f32.mrf.mxu0
    %v534 = vadd.f32 %v487, %v533
    %v535 = vpop.f32.mrf.mxu0
    %v536 = vadd.f32 %v487, %v535
    %537 = vdwg.mxu0
    %v538 = vmax.f32 %v499, 0.0
    %v539 = vmax.f32 %v501, 0.0
    %v540 = vmax.f32 %v504, 0.0
    %v541 = vmax.f32 %v506, 0.0
    %v542 = vmax.f32 %v509, 0.0
    %v543 = vmax.f32 %v511, 0.0
    %v544 = vmax.f32 %v514, 0.0
    %v545 = vmax.f32 %v516, 0.0
    %v546 = vmax.f32 %v519, 0.0
    %v547 = vmax.f32 %v521, 0.0
    %v548 = vmax.f32 %v524, 0.0
    %v549 = vmax.f32 %v526, 0.0
    %v550 = vmax.f32 %v529, 0.0
    %v551 = vmax.f32 %v531, 0.0
    %v552 = vmax.f32 %v534, 0.0
    %v553 = vmax.f32 %v536, 0.0
    %v554 = vpack.c.bf16 %v539, %v538
    %v555 = vpack.c.bf16 %v541, %v540
    %v556 = vpack.c.bf16 %v543, %v542
    %v557 = vpack.c.bf16 %v545, %v544
    %v558 = vpack.c.bf16 %v547, %v546
    %v559 = vpack.c.bf16 %v549, %v548
    %v560 = vpack.c.bf16 %v551, %v550
    %v561 = vpack.c.bf16 %v553, %v552
    %v562 = vunpack.c.l.bf16 %v36
    %v563 = vunpack.c.l.bf16 %v37
    %v564 = vunpack.c.l.bf16 %v38
    %v565 = vunpack.c.l.bf16 %v39
    %v566 = vunpack.c.l.bf16 %v40
    %v567 = vunpack.c.l.bf16 %v41
    %v568 = vunpack.c.l.bf16 %v42
    %v569 = vunpack.c.l.bf16 %v43
    %v570 = vunpack.c.l.bf16 %v44
    %v571 = vunpack.c.l.bf16 %v45
    %v572 = vunpack.c.l.bf16 %v46
    %v573 = vunpack.c.l.bf16 %v47
    %v574 = vunpack.c.l.bf16 %v48
    %v575 = vunpack.c.l.bf16 %v49
    %v576 = vunpack.c.l.bf16 %v50
    %v577 = vunpack.c.l.bf16 %v51
    %v578 = vadd.f32 %v562, %v563
    %v579 = vadd.f32 %v578, %v564
    %v580 = vadd.f32 %v579, %v565
    %v581 = vadd.f32 %v580, %v566
    %v582 = vadd.f32 %v581, %v567
    %v583 = vadd.f32 %v582, %v568
    %v584 = vadd.f32 %v583, %v569
    %v585 = vadd.f32 %v584, %v570
    %v586 = vadd.f32 %v585, %v571
    %v587 = vadd.f32 %v586, %v572
    %v588 = vadd.f32 %v587, %v573
    %v589 = vadd.f32 %v588, %v574
    %v590 = vadd.f32 %v589, %v575
    %v591 = vadd.f32 %v590, %v576
    %v592 = vadd.f32 %v591, %v577
    %v593 = vrot.slane %v592, 4
    %v594 = vadd.f32 %v592, %v593
    %v595 = vrot.slane %v594, 2
    %v596 = vadd.f32 %v594, %v595
    %v597 = vrot.slane %v596, 1
    %v598 = vadd.f32 %v596, %v597
    %v599 = vpack.c.bf16 %v598, %v598
    %600 = vmatpush.bf16.msra.mxu0 %v561
    %601 = vmatpush.bf16.msra.mxu0 %v560
    %602 = vmatpush.bf16.msra.mxu0 %v559
    %603 = vmatpush.bf16.msra.mxu0 %v558
    %604 = vmatpush.bf16.msra.mxu0 %v557
    %605 = vmatpush.bf16.msra.mxu0 %v556
    %606 = vmatpush.bf16.msra.mxu0 %v555
    %607 = vmatpush.bf16.msra.mxu0 %v554
    %608 = vmatmul.bf16.gmra.mxu0 %v599
    %v609 = vpop.f32.mrf.mxu0
    %v610 = vadd.f32 0.0, %v609
    %v611 = vpop.f32.mrf.mxu0
    %612 = vdwg.mxu0
    %v613 = vmul.f32 %v610, 0.0625
    %v614 = vpack.c.bf16 %v613, %v613
    %s615 = scalar_lea.vmem [#allocation2], 128
    %v616 = vld [vmem:[%s615] sm:$0xf]
    %v617 = vld [vmem:[%s615 + $0x4] sm:$0xf]
    %v618 = vld [vmem:[%s615 + $0x8] sm:$0xf]
    %v619 = vld [vmem:[%s615 + $0xc] sm:$0xf]
    %v620 = vld [vmem:[%s615 + $0x10] sm:$0xf]
    %v621 = vld [vmem:[%s615 + $0x14] sm:$0xf]
    %v622 = vld [vmem:[%s615 + $0x18] sm:$0xf]
    %v623 = vld [vmem:[%s615 + $0x1c] sm:$0xf]
    %v624 = vld [vmem:[%s615 + $0x20] sm:$0xf]
    %v625 = vld [vmem:[%s615 + $0x24] sm:$0xf]
    %v626 = vld [vmem:[%s615 + $0x28] sm:$0xf]
    %v627 = vld [vmem:[%s615 + $0x2c] sm:$0xf]
    %v628 = vld [vmem:[%s615 + $0x30] sm:$0xf]
    %v629 = vld [vmem:[%s615 + $0x34] sm:$0xf]
    %v630 = vld [vmem:[%s615 + $0x38] sm:$0xf]
    %v631 = vld [vmem:[%s615 + $0x3c] sm:$0xf]
    %s632 = scalar_lea.vmem %s4, 2
    %v633 = vld [vmem:[%s632] sm:$0x1]
    %v650 = vunpack.c.l.b16 %v616
    %v651 = vunpack.c.l.b16 %v617
    %v652 = vunpack.c.l.b16 %v618
    %v653 = vunpack.c.l.b16 %v619
    %v654 = vunpack.c.l.b16 %v620
    %v655 = vunpack.c.l.b16 %v621
    %v656 = vunpack.c.l.b16 %v622
    %v657 = vunpack.c.l.b16 %v623
    %v658 = vunpack.c.l.b16 %v624
    %v659 = vunpack.c.l.b16 %v625
    %v660 = vunpack.c.l.b16 %v626
    %v661 = vunpack.c.l.b16 %v627
    %v662 = vunpack.c.l.b16 %v628
    %v663 = vunpack.c.l.b16 %v629
    %v664 = vunpack.c.l.b16 %v630
    %v665 = vunpack.c.l.b16 %v631
    %v666 = vpack.c.b16 %v651, %v650
    %v667 = vpack.c.b16 %v653, %v652
    %v668 = vpack.c.b16 %v655, %v654
    %v669 = vpack.c.b16 %v657, %v656
    %v670 = vpack.c.b16 %v659, %v658
    %v671 = vpack.c.b16 %v661, %v660
    %v672 = vpack.c.b16 %v663, %v662
    %v673 = vpack.c.b16 %v665, %v664
    %682 = vmatpush.bf16.msra.mxu0 %v673
    %683 = vmatpush.bf16.msra.mxu0 %v672
    %684 = vmatpush.bf16.msra.mxu0 %v671
    %685 = vmatpush.bf16.msra.mxu0 %v670
    %686 = vmatpush.bf16.msra.mxu0 %v669
    %687 = vmatpush.bf16.msra.mxu0 %v668
    %688 = vmatpush.bf16.msra.mxu0 %v667
    %689 = vmatpush.bf16.msra.mxu0 %v666
    %690 = vmatmul.bf16.gmra.mxu0 %v614
    %v691 = vpop.f32.mrf.mxu0
    %v692 = vadd.f32 %v633, %v691
    %v693 = vpop.f32.mrf.mxu0
    %694 = vdwg.mxu0
    %v695 = vld [vmem:[%s2] sm:$0x1]
    %s696 = scalar_lea.vmem [#allocation2], 192
    %v697 = vld [vmem:[%s696] sm:$0xf]
    %v698 = vld [vmem:[%s696 + $0x4] sm:$0xf]
    %v699 = vld [vmem:[%s696 + $0x8] sm:$0xf]
    %v700 = vld [vmem:[%s696 + $0xc] sm:$0xf]
    %v701 = vld [vmem:[%s696 + $0x10] sm:$0xf]
    %v702 = vld [vmem:[%s696 + $0x14] sm:$0xf]
    %v703 = vld [vmem:[%s696 + $0x18] sm:$0xf]
    %v704 = vld [vmem:[%s696 + $0x1c] sm:$0xf]
    %v705 = vld [vmem:[%s696 + $0x20] sm:$0xf]
    %v706 = vld [vmem:[%s696 + $0x24] sm:$0xf]
    %v707 = vld [vmem:[%s696 + $0x28] sm:$0xf]
    %v708 = vld [vmem:[%s696 + $0x2c] sm:$0xf]
    %v709 = vld [vmem:[%s696 + $0x30] sm:$0xf]
    %v710 = vld [vmem:[%s696 + $0x34] sm:$0xf]
    %v711 = vld [vmem:[%s696 + $0x38] sm:$0xf]
    %v712 = vld [vmem:[%s696 + $0x3c] sm:$0xf]
    %s713 = scalar_lea.vmem %s4, 3
    %v714 = vld [vmem:[%s713] sm:$0x1]
    %v731 = vunpack.c.l.b16 %v697
    %v732 = vunpack.c.l.b16 %v698
    %v733 = vunpack.c.l.b16 %v699
    %v734 = vunpack.c.l.b16 %v700
    %v735 = vunpack.c.l.b16 %v701
    %v736 = vunpack.c.l.b16 %v702
    %v737 = vunpack.c.l.b16 %v703
    %v738 = vunpack.c.l.b16 %v704
    %v739 = vunpack.c.l.b16 %v705
    %v740 = vunpack.c.l.b16 %v706
    %v741 = vunpack.c.l.b16 %v707
    %v742 = vunpack.c.l.b16 %v708
    %v743 = vunpack.c.l.b16 %v709
    %v744 = vunpack.c.l.b16 %v710
    %v745 = vunpack.c.l.b16 %v711
    %v746 = vunpack.c.l.b16 %v712
    %v747 = vpack.c.b16 %v732, %v731
    %v748 = vpack.c.b16 %v734, %v733
    %v749 = vpack.c.b16 %v736, %v735
    %v750 = vpack.c.b16 %v738, %v737
    %v751 = vpack.c.b16 %v740, %v739
    %v752 = vpack.c.b16 %v742, %v741
    %v753 = vpack.c.b16 %v744, %v743
    %v754 = vpack.c.b16 %v746, %v745
    %763 = vmatpush.bf16.msra.mxu0 %v754
    %764 = vmatpush.bf16.msra.mxu0 %v753
    %765 = vmatpush.bf16.msra.mxu0 %v752
    %766 = vmatpush.bf16.msra.mxu0 %v751
    %767 = vmatpush.bf16.msra.mxu0 %v750
    %768 = vmatpush.bf16.msra.mxu0 %v749
    %769 = vmatpush.bf16.msra.mxu0 %v748
    %770 = vmatpush.bf16.msra.mxu0 %v747
    %771 = vmatmul.bf16.gmra.mxu0 %v695
    %v772 = vpop.f32.mrf.mxu0
    %v773 = vadd.f32 %v714, %v772
    %v774 = vpop.f32.mrf.mxu0
    %775 = vdwg.mxu0
    %v776 = vmax.f32 %v773, 0.0
    %v777 = vpack.c.bf16 %v776, %v776
    %s778 = scalar_lea.vmem [#allocation2], 256
    %v779 = vld [vmem:[%s778] sm:$0xf]
    %v780 = vld [vmem:[%s778 + $0x4] sm:$0xf]
    %v781 = vld [vmem:[%s778 + $0x8] sm:$0xf]
    %v782 = vld [vmem:[%s778 + $0xc] sm:$0xf]
    %v783 = vld [vmem:[%s778 + $0x10] sm:$0xf]
    %v784 = vld [vmem:[%s778 + $0x14] sm:$0xf]
    %v785 = vld [vmem:[%s778 + $0x18] sm:$0xf]
    %v786 = vld [vmem:[%s778 + $0x1c] sm:$0xf]
    %v787 = vld [vmem:[%s778 + $0x20] sm:$0xf]
    %v788 = vld [vmem:[%s778 + $0x24] sm:$0xf]
    %v789 = vld [vmem:[%s778 + $0x28] sm:$0xf]
    %v790 = vld [vmem:[%s778 + $0x2c] sm:$0xf]
    %v791 = vld [vmem:[%s778 + $0x30] sm:$0xf]
    %v792 = vld [vmem:[%s778 + $0x34] sm:$0xf]
    %v793 = vld [vmem:[%s778 + $0x38] sm:$0xf]
    %v794 = vld [vmem:[%s778 + $0x3c] sm:$0xf]
    %v795 = vpack.c.bf16 %v692, %v692
    %s796 = scalar_lea.vmem [#allocation2], 320
    %v797 = vld [vmem:[%s796] sm:$0xf]
    %v798 = vld [vmem:[%s796 + $0x4] sm:$0xf]
    %v799 = vld [vmem:[%s796 + $0x8] sm:$0xf]
    %v800 = vld [vmem:[%s796 + $0xc] sm:$0xf]
    %v801 = vld [vmem:[%s796 + $0x10] sm:$0xf]
    %v802 = vld [vmem:[%s796 + $0x14] sm:$0xf]
    %v803 = vld [vmem:[%s796 + $0x18] sm:$0xf]
    %v804 = vld [vmem:[%s796 + $0x1c] sm:$0xf]
    %v805 = vld [vmem:[%s796 + $0x20] sm:$0xf]
    %v806 = vld [vmem:[%s796 + $0x24] sm:$0xf]
    %v807 = vld [vmem:[%s796 + $0x28] sm:$0xf]
    %v808 = vld [vmem:[%s796 + $0x2c] sm:$0xf]
    %v809 = vld [vmem:[%s796 + $0x30] sm:$0xf]
    %v810 = vld [vmem:[%s796 + $0x34] sm:$0xf]
    %v811 = vld [vmem:[%s796 + $0x38] sm:$0xf]
    %v812 = vld [vmem:[%s796 + $0x3c] sm:$0xf]
    %v829 = vunpack.c.l.b16 %v797
    %v830 = vunpack.c.l.b16 %v798
    %v831 = vunpack.c.l.b16 %v799
    %v832 = vunpack.c.l.b16 %v800
    %v833 = vunpack.c.l.b16 %v801
    %v834 = vunpack.c.l.b16 %v802
    %v835 = vunpack.c.l.b16 %v803
    %v836 = vunpack.c.l.b16 %v804
    %v837 = vunpack.c.l.b16 %v805
    %v838 = vunpack.c.l.b16 %v806
    %v839 = vunpack.c.l.b16 %v807
    %v840 = vunpack.c.l.b16 %v808
    %v841 = vunpack.c.l.b16 %v809
    %v842 = vunpack.c.l.b16 %v810
    %v843 = vunpack.c.l.b16 %v811
    %v844 = vunpack.c.l.b16 %v812
    %v845 = vpack.c.b16 %v830, %v829
    %v846 = vpack.c.b16 %v832, %v831
    %v847 = vpack.c.b16 %v834, %v833
    %v848 = vpack.c.b16 %v836, %v835
    %v849 = vpack.c.b16 %v838, %v837
    %v850 = vpack.c.b16 %v840, %v839
    %v851 = vpack.c.b16 %v842, %v841
    %v852 = vpack.c.b16 %v844, %v843
    %861 = vmatpush.bf16.msra.mxu0 %v852
    %862 = vmatpush.bf16.msra.mxu0 %v851
    %863 = vmatpush.bf16.msra.mxu0 %v850
    %864 = vmatpush.bf16.msra.mxu0 %v849
    %865 = vmatpush.bf16.msra.mxu0 %v848
    %866 = vmatpush.bf16.msra.mxu0 %v847
    %867 = vmatpush.bf16.msra.mxu0 %v846
    %868 = vmatpush.bf16.msra.mxu0 %v845
    %869 = vmatmul.bf16.gmra.mxu0 %v795
    %v870 = vpop.f32.mrf.mxu0
    %v871 = vadd.f32 0.0, %v870
    %v872 = vpop.f32.mrf.mxu0
    %873 = vdwg.mxu0
    %v890 = vunpack.c.l.b16 %v779
    %v891 = vunpack.c.l.b16 %v780
    %v892 = vunpack.c.l.b16 %v781
    %v893 = vunpack.c.l.b16 %v782
    %v894 = vunpack.c.l.b16 %v783
    %v895 = vunpack.c.l.b16 %v784
    %v896 = vunpack.c.l.b16 %v785
    %v897 = vunpack.c.l.b16 %v786
    %v898 = vunpack.c.l.b16 %v787
    %v899 = vunpack.c.l.b16 %v788
    %v900 = vunpack.c.l.b16 %v789
    %v901 = vunpack.c.l.b16 %v790
    %v902 = vunpack.c.l.b16 %v791
    %v903 = vunpack.c.l.b16 %v792
    %v904 = vunpack.c.l.b16 %v793
    %v905 = vunpack.c.l.b16 %v794
    %v906 = vpack.c.b16 %v891, %v890
    %v907 = vpack.c.b16 %v893, %v892
    %v908 = vpack.c.b16 %v895, %v894
    %v909 = vpack.c.b16 %v897, %v896
    %v910 = vpack.c.b16 %v899, %v898
    %v911 = vpack.c.b16 %v901, %v900
    %v912 = vpack.c.b16 %v903, %v902
    %v913 = vpack.c.b16 %v905, %v904
    %922 = vmatpush.bf16.msra.mxu0 %v913
    %923 = vmatpush.bf16.msra.mxu0 %v912
    %924 = vmatpush.bf16.msra.mxu0 %v911
    %925 = vmatpush.bf16.msra.mxu0 %v910
    %926 = vmatpush.bf16.msra.mxu0 %v909
    %927 = vmatpush.bf16.msra.mxu0 %v908
    %928 = vmatpush.bf16.msra.mxu0 %v907
    %929 = vmatpush.bf16.msra.mxu0 %v906
    %930 = vmatmul.bf16.gmra.mxu0 %v777
    %v931 = vpop.f32.mrf.mxu0
    %v932 = vadd.f32 %v871, %v931
    %v933 = vpop.f32.mrf.mxu0
    %934 = vdwg.mxu0
    %s935 = scalar_lea.vmem %s4, 4
    %v936 = vld [vmem:[%s935] sm:$0x1]
    %v937 = vadd.f32 %v932, %v936
    %v938 = vmax.f32 %v937, 0.0
    %v939 = vpack.c.bf16 %v938, %v938
    %s940 = scalar_lea.vmem [#allocation2], 384
    %v941 = vld [vmem:[%s940] sm:$0xf]
    %v942 = vld [vmem:[%s940 + $0x4] sm:$0xf]
    %v943 = vld [vmem:[%s940 + $0x8] sm:$0xf]
    %v944 = vld [vmem:[%s940 + $0xc] sm:$0xf]
    %v945 = vld [vmem:[%s940 + $0x10] sm:$0xf]
    %v946 = vld [vmem:[%s940 + $0x14] sm:$0xf]
    %v947 = vld [vmem:[%s940 + $0x18] sm:$0xf]
    %v948 = vld [vmem:[%s940 + $0x1c] sm:$0xf]
    %v949 = vld [vmem:[%s940 + $0x20] sm:$0xf]
    %v950 = vld [vmem:[%s940 + $0x24] sm:$0xf]
    %v951 = vld [vmem:[%s940 + $0x28] sm:$0xf]
    %v952 = vld [vmem:[%s940 + $0x2c] sm:$0xf]
    %v953 = vld [vmem:[%s940 + $0x30] sm:$0xf]
    %v954 = vld [vmem:[%s940 + $0x34] sm:$0xf]
    %v955 = vld [vmem:[%s940 + $0x38] sm:$0xf]
    %v956 = vld [vmem:[%s940 + $0x3c] sm:$0xf]
    %s957 = scalar_lea.vmem %s4, 5
    %v958 = vld [vmem:[%s957] sm:$0x1]
    %v975 = vunpack.c.l.b16 %v941
    %v976 = vunpack.c.l.b16 %v942
    %v977 = vunpack.c.l.b16 %v943
    %v978 = vunpack.c.l.b16 %v944
    %v979 = vunpack.c.l.b16 %v945
    %v980 = vunpack.c.l.b16 %v946
    %v981 = vunpack.c.l.b16 %v947
    %v982 = vunpack.c.l.b16 %v948
    %v983 = vunpack.c.l.b16 %v949
    %v984 = vunpack.c.l.b16 %v950
    %v985 = vunpack.c.l.b16 %v951
    %v986 = vunpack.c.l.b16 %v952
    %v987 = vunpack.c.l.b16 %v953
    %v988 = vunpack.c.l.b16 %v954
    %v989 = vunpack.c.l.b16 %v955
    %v990 = vunpack.c.l.b16 %v956
    %v991 = vpack.c.b16 %v976, %v975
    %v992 = vpack.c.b16 %v978, %v977
    %v993 = vpack.c.b16 %v980, %v979
    %v994 = vpack.c.b16 %v982, %v981
    %v995 = vpack.c.b16 %v984, %v983
    %v996 = vpack.c.b16 %v986, %v985
    %v997 = vpack.c.b16 %v988, %v987
    %v998 = vpack.c.b16 %v990, %v989
    %1007 = vmatpush.bf16.msra.mxu0 %v998
    %1008 = vmatpush.bf16.msra.mxu0 %v997
    %1009 = vmatpush.bf16.msra.mxu0 %v996
    %1010 = vmatpush.bf16.msra.mxu0 %v995
    %1011 = vmatpush.bf16.msra.mxu0 %v994
    %1012 = vmatpush.bf16.msra.mxu0 %v993
    %1013 = vmatpush.bf16.msra.mxu0 %v992
    %1014 = vmatpush.bf16.msra.mxu0 %v991
    %1015 = vmatmul.bf16.gmra.mxu0 %v939
    %v1016 = vpop.f32.mrf.mxu0
    %v1017 = vadd.f32 %v958, %v1016
    %v1018 = vpop.f32.mrf.mxu0
    %1019 = vdwg.mxu0
    %1020 = vst [vmem:[%s5] sm:$0x1] %v1017
    // Predicated region
    $region26: #{fc_model_graph_forward.1} parent=1 // pred_check
      _
    $region27: #{fc_model_graph_forward.1} parent=1 // pred_check_branch
      %1022 = sbr.rel (0) target = $region29
    $region28: #{fc_model_graph_forward.1} parent=1 // pred_region
      _
    $region29: #{fc_model_graph_forward.1} parent=1 // pred_fallthru
      _
    // Predicated region
    $region30: #{fc_model_graph_forward.1} parent=1 // pred_check
      _
    $region31: #{fc_model_graph_forward.1} parent=1 // pred_check_branch
      %1024 = sbr.rel (0) target = $region33
    $region32: #{fc_model_graph_forward.1} parent=1 // pred_region
      _
    $region33: #{fc_model_graph_forward.1} parent=1 // pred_fallthru
      _
    %1025 = vsyncpa [#allocation3], 1

</llo_original>
